<compile_context>
chip_gen: v6e
topology: v6e:2x2x1
jax: 0.10.0
libtpu: 0.0.40
codegen_flags: <defaults>
</compile_context>

<pallas_src>
import functools

import numpy as np
import jax
import jax.numpy as jnp
from jax.experimental import pallas as pl
from jax.experimental.pallas import tpu as pltpu


# ----------------------------- irreps helpers -------------------------------
# Minimal irreps representation: list of (multiplicity, l) tuples.
def irreps_dim(irreps):
    return sum(mul * (2 * l + 1) for mul, l in irreps)


def irreps_num(irreps):
    return sum(mul for mul, _ in irreps)


def _round_up(v, m):
    return ((v + m - 1) // m) * m


def _pick_tile(n, bytes_per_unit, *, vmem_budget_bytes=16 << 20, cap=8192, align=128):
    """Largest `align`-multiple tile along an axis of extent `n` such that the
    double-buffered working set stays inside `vmem_budget_bytes` (sized off the
    VMEM limit, not a fixed 128), capped at `cap`, and small enough that the
    grid keeps >= 2 steps so both v7x TensorCores receive work."""
    t = (vmem_budget_bytes // max(int(bytes_per_unit), 1)) // align * align
    t = max(align, min(cap, t))
    if n > align:
        t = min(t, _round_up(_round_up(n, 2) // 2, align))   # >= 2 grid steps
    return int(t)


def _vmem_limit(step_bytes):
    # double-buffered working set + headroom; keep well under v7x's 64 MiB.
    return int(min(48 << 20, max(32 << 20, 2 * int(step_bytes))))


# ------------------------------ Pallas kernels -------------------------------
def _swish_gate_kernel(x_ref, o_ref, *, d_s, d_gate, irreps_gated):
    """Channel-first gate. x_ref: (D_in, T), o_ref: (D_out, T); T on lanes."""
    n_sg = d_s + d_gate

    # One sigmoid over the contiguous [scalars | gates] sublane slab: halves
    # the EUP (transcendental) pushes vs. two separate sigmoids. Elementwise
    # math in f32 (no-op for f32 inputs; for bf16 inputs HBM traffic is still
    # halved and v5e's VPU/EUP have no native bf16 anyway).
    sig = jax.nn.sigmoid(x_ref[:n_sg, :].astype(jnp.float32))   # (d_s+d_gate, T)

    if d_s > 0:   # guard d_s == 0 edge case (no zero-width slices emitted)
        scalars = x_ref[:d_s, :].astype(jnp.float32)
        o_ref[:d_s, :] = (scalars * sig[:d_s, :]).astype(o_ref.dtype)

    # Gated irreps: each gate scalar row (1, T) scales the (2l+1) rows of its
    # irrep instance. Static slice stores -- no concatenate, no expansion
    # matrix, no extra VMEM copy. Structure is fully compile-time.
    g_off, c_off = 0, 0
    for mul, l in irreps_gated:
        r = 2 * l + 1
        for _ in range(mul):
            gate_row = sig[d_s + g_off:d_s + g_off + 1, :]                 # (1, T)
            rows = x_ref[n_sg + c_off:n_sg + c_off + r, :].astype(jnp.float32)
            o_ref[d_s + c_off:d_s + c_off + r, :] = (rows * gate_row).astype(o_ref.dtype)
            g_off += 1
            c_off += r


def _silu_kernel(x_ref, o_ref):
    x = x_ref[...].astype(jnp.float32)
    o_ref[...] = (x * jax.nn.sigmoid(x)).astype(o_ref.dtype)


# --------------------------------- wrapper -----------------------------------
def o3_swish_gate(x, irreps_scalars, irreps_gate, irreps_gated, *, channel_first=False):
    """O3SwishGate forward.

    x: (N, D_in) channel-last (the PyTorch module's layout), or (D_in, N) when
       channel_first=True (preferred in a fused / production setting: no
       wrapper transposes are emitted then).
    """
    d_s = irreps_dim(irreps_scalars)
    d_gate = irreps_dim(irreps_gate)
    d_gated = irreps_dim(irreps_gated)
    itemsize = jnp.dtype(x.dtype).itemsize

    # ----------------- fallback: no gated irreps -> plain SiLU ---------------
    if irreps_num(irreps_gated) == 0:
        # Pointwise, memory-bound; big VMEM-budgeted row tiles, ragged N ok.
        # TODO(synk): in a full model, let XLA fuse this into the producer
        # instead of running a standalone pallas_call.
        N, D = x.shape
        bytes_per_row = 2 * 2 * D * itemsize          # double-buffered in + out
        tile_n = _pick_tile(N, bytes_per_row, align=8)
        return pl.pallas_call(
            _silu_kernel,
            out_shape=jax.ShapeDtypeStruct((N, D), x.dtype),
            grid=(pl.cdiv(N, tile_n),),
            in_specs=[pl.BlockSpec((tile_n, D), lambda i: (i, 0))],
            out_specs=pl.BlockSpec((tile_n, D), lambda i: (i, 0)),
            compiler_params=pltpu.CompilerParams(
                dimension_semantics=("parallel",),
                vmem_limit_bytes=_vmem_limit(bytes_per_row * tile_n)),
        )(x)

    # ------------------------------- gated path ------------------------------
    assert irreps_num(irreps_gate) == irreps_num(irreps_gated), \
        "one gate scalar per gated irrep instance"
    D_in = d_s + d_gate + d_gated
    D_out = d_s + d_gated

    if channel_first:
        xt = x
        assert xt.shape[0] == D_in, "input feature dim mismatch"
    else:
        assert x.shape[1] == D_in, "input feature dim mismatch"
        xt = x.T                       # (D_in, N): layout plumbing only
    N = xt.shape[1]

    bytes_per_lane = 2 * (D_in + D_out) * itemsize    # double-buffered in + out
    tile = _pick_tile(N, bytes_per_lane, align=128)

    kernel = functools.partial(
        _swish_gate_kernel, d_s=d_s, d_gate=d_gate,
        irreps_gated=tuple(tuple(t) for t in irreps_gated))

    out_t = pl.pallas_call(
        kernel,
        out_shape=jax.ShapeDtypeStruct((D_out, N), x.dtype),
        grid=(pl.cdiv(N, tile),),
        in_specs=[pl.BlockSpec((D_in, tile), lambda i: (0, i))],
        out_specs=pl.BlockSpec((D_out, tile), lambda i: (0, i)),
        compiler_params=pltpu.CompilerParams(
            dimension_semantics=("parallel",),
            vmem_limit_bytes=_vmem_limit(bytes_per_lane * tile)),
    )(xt)

    return out_t if channel_first else out_t.T


# ----------------------------- pure-JAX reference ----------------------------
def _gate_expansion_matrix(irreps_gated):
    n_g, d_g = irreps_num(irreps_gated), irreps_dim(irreps_gated)
    E = np.zeros((n_g, d_g), dtype=np.float32)
    g, c = 0, 0
    for mul, l in irreps_gated:
        dim = 2 * l + 1
        for _ in range(mul):
            E[g, c:c + dim] = 1.0
            g += 1
            c += dim
    return jnp.asarray(E)


def o3_swish_gate_ref(x, irreps_scalars, irreps_gate, irreps_gated):
    d_s = irreps_dim(irreps_scalars)
    d_gate = irreps_dim(irreps_gate)
    if irreps_num(irreps_gated) == 0:
        return x * jax.nn.sigmoid(x)
    scalars = x[:, :d_s]
    gates = x[:, d_s:d_s + d_gate]
    gated = x[:, d_s + d_gate:]
    E = _gate_expansion_matrix(irreps_gated)
    out_s = scalars * jax.nn.sigmoid(scalars)
    out_g = gated * (jax.nn.sigmoid(gates) @ E)
    return jnp.concatenate([out_s, out_g], axis=-1)


# ------------------------------------ main ------------------------------------
if __name__ == "__main__":
    # irreps_g_scalars = 8x0e, irreps_g_gate = 4x0e, irreps_g_gated = 4x1o
    irreps_scalars = [(8, 0)]   # dim 8
    irreps_gate = [(4, 0)]      # dim 4
    irreps_gated = [(4, 1)]     # dim 12
    N = 1037                    # ragged on purpose: exercises the cdiv grid / edge masking
    D_in = irreps_dim(irreps_scalars) + irreps_dim(irreps_gate) + irreps_dim(irreps_gated)

    key = jax.random.PRNGKey(0)
    x = jax.random.normal(key, (N, D_in), dtype=jnp.float32)

    out = jax.block_until_ready(
        o3_swish_gate(x, irreps_scalars, irreps_gate, irreps_gated))
    ref = o3_swish_gate_ref(x, irreps_scalars, irreps_gate, irreps_gated)
    np.testing.assert_allclose(np.asarray(out), np.asarray(ref), rtol=1e-5, atol=1e-5)

    # Fallback path (no gated irreps -> plain SiLU), also with a ragged batch.
    x2 = jax.random.normal(jax.random.PRNGKey(0), (300, 24), dtype=jnp.float32)
    out2 = jax.block_until_ready(o3_swish_gate(x2, [(24, 0)], [], []))
    np.testing.assert_allclose(np.asarray(out2),
                               np.asarray(x2 * jax.nn.sigmoid(x2)),
                               rtol=1e-5, atol=1e-5)

    print("KERNEL_OK")
</pallas_src>

<mosaic_0001>
module attributes {stable_mosaic.version = 11 : i64} {
  func.func @_swish_gate_kernel(%arg0: i32, %arg1: memref<24x640xf32, #tpu.memory_space<vmem>>, %arg2: memref<20x640xf32, #tpu.memory_space<vmem>>) attributes {dimension_semantics = [#tpu.dimension_semantics<parallel>], iteration_bounds = array<i64: 2>, scalar_prefetch = 0 : i64, scratch_operands = 0 : i64, tpu.core_type = #tpu.core_type<tc>, window_params = [{transform_indices = @transform_0, window_bounds = array<i64: 24, 640>}, {transform_indices = @transform_1, window_bounds = array<i64: 20, 640>}]} {
    %c0 = arith.constant 0 : index
    %c0_0 = arith.constant 0 : index
    %0 = vector.load %arg1[%c0, %c0_0] : memref<24x640xf32, #tpu.memory_space<vmem>>, vector<12x640xf32>
    %1 = arith.negf %0 : vector<12x640xf32>
    %2 = math.exp %1 : vector<12x640xf32>
    %cst = arith.constant 1.000000e+00 : f32
    %3 = vector.broadcast %cst : f32 to vector<12x640xf32>
    %4 = arith.addf %3, %2 : vector<12x640xf32>
    %5 = arith.divf %3, %4 : vector<12x640xf32>
    %c0_1 = arith.constant 0 : index
    %c0_2 = arith.constant 0 : index
    %6 = vector.load %arg1[%c0_1, %c0_2] : memref<24x640xf32, #tpu.memory_space<vmem>>, vector<8x640xf32>
    %7 = vector.extract_strided_slice %5 {offsets = [0, 0], sizes = [8, 640], strides = [1, 1]} : vector<12x640xf32> to vector<8x640xf32>
    %8 = arith.mulf %6, %7 : vector<8x640xf32>
    %c0_3 = arith.constant 0 : index
    %c0_4 = arith.constant 0 : index
    %9 = vector.load %arg2[%c0_3, %c0_4] : memref<20x640xf32, #tpu.memory_space<vmem>>, vector<8x640xf32>
    tpu.vector_store %arg2[%c0_3, %c0_4], %8 {strides = array<i32>} : memref<20x640xf32, #tpu.memory_space<vmem>>, vector<8x640xf32>,
    %10 = vector.extract_strided_slice %5 {offsets = [8, 0], sizes = [1, 640], strides = [1, 1]} : vector<12x640xf32> to vector<1x640xf32>
    %c12 = arith.constant 12 : index
    %c0_5 = arith.constant 0 : index
    %11 = vector.load %arg1[%c12, %c0_5] : memref<24x640xf32, #tpu.memory_space<vmem>>, vector<3x640xf32>
    %12 = vector.broadcast %10 : vector<1x640xf32> to vector<3x640xf32>
    %13 = arith.mulf %11, %12 : vector<3x640xf32>
    %c8 = arith.constant 8 : index
    %c0_6 = arith.constant 0 : index
    %14 = vector.load %arg2[%c8, %c0_6] : memref<20x640xf32, #tpu.memory_space<vmem>>, vector<3x640xf32>
    tpu.vector_store %arg2[%c8, %c0_6], %13 {strides = array<i32>} : memref<20x640xf32, #tpu.memory_space<vmem>>, vector<3x640xf32>,
    %15 = vector.extract_strided_slice %5 {offsets = [9, 0], sizes = [1, 640], strides = [1, 1]} : vector<12x640xf32> to vector<1x640xf32>
    %c15 = arith.constant 15 : index
    %c0_7 = arith.constant 0 : index
    %16 = vector.load %arg1[%c15, %c0_7] : memref<24x640xf32, #tpu.memory_space<vmem>>, vector<3x640xf32>
    %17 = vector.broadcast %15 : vector<1x640xf32> to vector<3x640xf32>
    %18 = arith.mulf %16, %17 : vector<3x640xf32>
    %c11 = arith.constant 11 : index
    %c0_8 = arith.constant 0 : index
    %19 = vector.load %arg2[%c11, %c0_8] : memref<20x640xf32, #tpu.memory_space<vmem>>, vector<3x640xf32>
    tpu.vector_store %arg2[%c11, %c0_8], %18 {strides = array<i32>} : memref<20x640xf32, #tpu.memory_space<vmem>>, vector<3x640xf32>,
    %20 = vector.extract_strided_slice %5 {offsets = [10, 0], sizes = [1, 640], strides = [1, 1]} : vector<12x640xf32> to vector<1x640xf32>
    %c18 = arith.constant 18 : index
    %c0_9 = arith.constant 0 : index
    %21 = vector.load %arg1[%c18, %c0_9] : memref<24x640xf32, #tpu.memory_space<vmem>>, vector<3x640xf32>
    %22 = vector.broadcast %20 : vector<1x640xf32> to vector<3x640xf32>
    %23 = arith.mulf %21, %22 : vector<3x640xf32>
    %c14 = arith.constant 14 : index
    %c0_10 = arith.constant 0 : index
    %24 = vector.load %arg2[%c14, %c0_10] : memref<20x640xf32, #tpu.memory_space<vmem>>, vector<3x640xf32>
    tpu.vector_store %arg2[%c14, %c0_10], %23 {strides = array<i32>} : memref<20x640xf32, #tpu.memory_space<vmem>>, vector<3x640xf32>,
    %25 = vector.extract_strided_slice %5 {offsets = [11, 0], sizes = [1, 640], strides = [1, 1]} : vector<12x640xf32> to vector<1x640xf32>
    %c21 = arith.constant 21 : index
    %c0_11 = arith.constant 0 : index
    %26 = vector.load %arg1[%c21, %c0_11] : memref<24x640xf32, #tpu.memory_space<vmem>>, vector<3x640xf32>
    %27 = vector.broadcast %25 : vector<1x640xf32> to vector<3x640xf32>
    %28 = arith.mulf %26, %27 : vector<3x640xf32>
    %c17 = arith.constant 17 : index
    %c0_12 = arith.constant 0 : index
    %29 = vector.load %arg2[%c17, %c0_12] : memref<20x640xf32, #tpu.memory_space<vmem>>, vector<3x640xf32>
    tpu.vector_store %arg2[%c17, %c0_12], %28 {strides = array<i32>} : memref<20x640xf32, #tpu.memory_space<vmem>>, vector<3x640xf32>,
    return
  }
  func.func @transform_0(%arg0: i32) -> (i32, i32) {
    %c0_i32 = arith.constant 0 : i32
    %c0_i32_0 = arith.constant 0 : i32
    return %c0_i32, %arg0 : i32, i32
  }
  func.func @transform_1(%arg0: i32) -> (i32, i32) {
    %c0_i32 = arith.constant 0 : i32
    %c0_i32_0 = arith.constant 0 : i32
    return %c0_i32, %arg0 : i32, i32
  }
}

</mosaic_0001>

<llo_original>
// kernel: tpu_custom_call.1
$region0: #{tpu_custom_call.1}
  #allocation0 [shape = 'u32[]', space=smem, size = 0x4, offset = 0x4, fixed_abs, tag = 'smem constant byte address 0x4 - core index']
  #allocation1 [shape = 'u32[144,128]{1,0:T(1,128)}', space=vmem, size = 0x12000, scoped, tag = 'internal scratch']
  %s0 = inlined_call_operand.hbm [shape: f32[24,1037], index: 0, kind: input, shape index: {}]
  %s1 = inlined_call_operand.hbm [shape: f32[20,1037], index: 1, kind: output, shape index: {}]
  %s2 = sld [smem:[#allocation0]]
  $region41: #{tpu_custom_call.1} parent=0
    _
  %s4 = ssub.s32 1, %s2
  %s5 = scalar_select 0, %s4, %s2
  $region1: #{tpu_custom_call.1} parent=0
    #allocation2 [shape = 'u8[122880]{0}', space=vmem, size = 0x1e000, scoped, tag = 'input window, operand 0']
    #allocation3 [shape = 's32[2]{0}', space=sflag, size = 0x8, scoped, tag = 'scoped memory for tpu_custom_call.1']
    #allocation4 [shape = 's32[2]{0}', space=sflag, size = 0x8, scoped, tag = 'scoped memory for tpu_custom_call.1']
    #allocation5 [shape = 'u8[122880]{0}', space=vmem, size = 0x1e000, scoped, tag = 'output window, operand 0']
    %6 = vsyncpa [#allocation3], 0
    %s7 = scalar_lea.sflag [#allocation3], 1
    %8 = vsyncpa %s7, 0
    %9 = vsyncpa [#allocation4], 0
    %s10 = scalar_lea.sflag [#allocation4], 1
    %11 = vsyncpa %s10, 0
    loop: start=0, step=1, limit=4
    $region2: #{tpu_custom_call.1} parent=1 // loop_pre_header
      _
    $region3: #{tpu_custom_call.1} parent=1 // loop_header
      %s13 = sphi 0, %s17
      %p14 = scmp.ge.s32.totalorder %s13, 4
      %s23 = sphi 0, %s25
      %s26 = sphi 0, %s23
      %s27 = sphi 0, %s26
      %s43 = sphi 0, %s27
      %s49 = sphi 0, %s51
      %s52 = sphi 0, %s49
      %s53 = sphi 0, %s52
      %s69 = sphi 0, %s53
    $region4: #{tpu_custom_call.1} parent=1 // loop_header_branch
      %16 = sbr.rel (%p14) target = $region8
    $region5: #{tpu_custom_call.1} parent=1 // loop_body
      %s18 = ssub.s32 %s13, 1
      %s19 = ssub.s32 %s13, 2
      %s20 = sadd.s32 %s13, 1
      %s21 = ssub.s32 %s13, %s20
      %p22 = scmp.eq.s32.totalorder %s21, 0
      %s24 = sadd.s32 %s23, 1
      %s25 = scalar_select %p22, %s23, %s24
      %p28 = pneg %p22
      %p29 = scmp.eq.s32.totalorder %s13, 1
      %p30 = por %p28, %p29
      %p31 = scmp.ne.s32.totalorder %s23, %s26
      %p32 = scmp.eq.s32.totalorder %s13, 0
      %p33 = por %p31, %p32
      %p34 = scmp.ne.s32.totalorder %s23, %s26
      %p35 = scmp.eq.s32.totalorder %s18, 1
      %p36 = por %p34, %p35
      %p37 = scmp.ne.s32.totalorder %s26, %s27
      %p38 = scmp.eq.s32.totalorder %s18, 0
      %p39 = por %p37, %p38
      %p40 = scmp.ne.s32.totalorder %s26, %s27
      %p41 = scmp.eq.s32.totalorder %s19, 1
      %p42 = por %p40, %p41
      %p44 = scmp.ne.s32.totalorder %s27, %s43
      %p45 = scmp.eq.s32.totalorder %s19, 0
      %p46 = por %p44, %p45
      %s47 = ssub.s32 %s13, %s20
      %p48 = scmp.eq.s32.totalorder %s47, 0
      %s50 = sadd.s32 %s49, 1
      %s51 = scalar_select %p48, %s49, %s50
      %p54 = pneg %p48
      %p55 = scmp.eq.s32.totalorder %s13, 1
      %p56 = por %p54, %p55
      %p57 = scmp.ne.s32.totalorder %s49, %s52
      %p58 = scmp.eq.s32.totalorder %s13, 0
      %p59 = por %p57, %p58
      %p60 = scmp.ne.s32.totalorder %s49, %s52
      %p61 = scmp.eq.s32.totalorder %s18, 1
      %p62 = por %p60, %p61
      %p63 = scmp.ne.s32.totalorder %s52, %s53
      %p64 = scmp.eq.s32.totalorder %s18, 0
      %p65 = por %p63, %p64
      %p66 = scmp.ne.s32.totalorder %s52, %s53
      %p67 = scmp.eq.s32.totalorder %s19, 1
      %p68 = por %p66, %p67
      %p70 = scmp.ne.s32.totalorder %s53, %s69
      %p71 = scmp.eq.s32.totalorder %s19, 0
      %p72 = por %p70, %p71
      %p73 = scmp.le.s32.totalorder 1, %s13
      %p74 = scmp.lt.s32.totalorder %s13, 3
      %p75 = pnand %p73, %p74
      %p76 = pneg %p75
      // Predicated region
      $region9: #{tpu_custom_call.1} parent=5 // pred_check
        _
      $region10: #{tpu_custom_call.1} parent=5 // pred_check_branch
        %78 = sbr.rel (%p75) target = $region12
      $region11: #{tpu_custom_call.1} parent=5 // pred_region
        %s79 = ssub.s32 %s13, 1
      $region12: #{tpu_custom_call.1} parent=5 // pred_fallthru
        _
      %p80 = scmp.lt.s32.totalorder %s13, 2
      // Predicated region
      $region13: #{tpu_custom_call.1} parent=5 // pred_check
        %p81 = pneg %p80
      $region14: #{tpu_custom_call.1} parent=5 // pred_check_branch
        %83 = sbr.rel (%p81) target = $region16
      $region15: #{tpu_custom_call.1} parent=5 // pred_region
        // Predicated region
        $region17: #{tpu_custom_call.1} parent=15 // pred_check
          %p84 = pneg %p33
        $region18: #{tpu_custom_call.1} parent=15 // pred_check_branch
          %86 = sbr.rel (%p84) target = $region20
        $region19: #{tpu_custom_call.1} parent=15 // pred_region
          %s87 = sand.u32 %s23, 1
          %s88 = scalar_lea.sflag [#allocation3], %s87
          %s89 = sand.u32 %s23, 1
          %s90 = smul.addr %s89, 120
          %s91 = scalar_lea.vmem [#allocation2], %s90
          %s92 = smul.u32 5, %s13
          %s93 = ssub.s32 9, %s92
          %p94 = scmp.lt.s32.totalorder %s93, 5
          %s95 = scalar_select %p94, %s93, 5
          %s96 = smul.u32 384, %s95
          %s98 = ssub.s32 1920, %s96
          %99 = vsyncadd %s88, %s98
          %p100 = scmp.ne.s32.totalorder 0, %s96
          %s101 = smul.addr %s92, 128
          %s102 = scalar_lea.hbm %s0, %s101
          %s103 = smul.u32 %s95, 8
          %s104 = smul.u32 %s103, 3
          %s105 = sshll.u32 %s91, 4
          %s106 = int_to_ptr.vmem [resolvable:$true] %s105
          %s107 = sshll.u32 %s104, 4
          %111 = dma.hbm_to_vmem [thread:$0]  (%p100), %s102, %s107, %s106, %s88, 1152, 640, %s103
        $region20: #{tpu_custom_call.1} parent=15 // pred_fallthru
          _
      $region16: #{tpu_custom_call.1} parent=5 // pred_fallthru
        _
      %p112 = scmp.le.s32.totalorder 1, %s13
      %p113 = scmp.lt.s32.totalorder %s13, 3
      %p114 = pnand %p112, %p113
      %p115 = pneg %p114
      // Predicated region
      $region21: #{tpu_custom_call.1} parent=5 // pred_check
        _
      $region22: #{tpu_custom_call.1} parent=5 // pred_check_branch
        %117 = sbr.rel (%p114) target = $region24
      $region23: #{tpu_custom_call.1} parent=5 // pred_region
        %s118 = ssub.s32 %s13, 1
        %s119 = sand.u32 %s26, 1
        %s120 = scalar_lea.sflag [#allocation3], %s119
        %s121 = sand.u32 %s26, 1
        %s122 = smul.addr %s121, 120
        %s123 = scalar_lea.vmem [#allocation2], %s122
        // Predicated region
        $region25: #{tpu_custom_call.1} parent=23 // pred_check
          %p124 = pneg %p39
        $region26: #{tpu_custom_call.1} parent=23 // pred_check_branch
          %126 = sbr.rel (%p124) target = $region28
        $region27: #{tpu_custom_call.1} parent=23 // pred_region
          %127 = dma.done %s120, 1920
        $region28: #{tpu_custom_call.1} parent=23 // pred_fallthru
          _
        %s128 = sand.u32 %s26, 1
        %s129 = scalar_lea.sflag [#allocation3], %s128
        %s130 = sand.u32 %s26, 1
        %s131 = smul.addr %s130, 120
        %s132 = scalar_lea.vmem [#allocation2], %s131
        %p133 = pneg %p39
        %p134 = pneg %p36
        %p135 = pneg %p65
        %p136 = pneg %p62
        %s137 = sand.u32 %s52, 1
        %s138 = scalar_lea.sflag [#allocation4], %s137
        %s139 = sand.u32 %s52, 1
        %s140 = smul.addr %s139, 120
        %s141 = scalar_lea.vmem [#allocation5], %s140
        %s142 = smul.u32 5, %s18
        %s143 = ssub.s32 9, %s142
        %p144 = scmp.lt.s32.totalorder %s143, 5
        %s145 = scalar_select %p144, %s143, 5
        %s146 = smul.u32 384, %s145
        %s147 = smul.u32 5, %s18
        %s148 = ssub.s32 9, %s147
        %p149 = scmp.lt.s32.totalorder %s148, 5
        %s150 = scalar_select %p149, %s148, 5
        %s151 = smul.u32 384, %s150
        %v152 = vld [vmem:[%s123] sm:$0xff]
        %v153 = vld [vmem:[%s123 + $0x8] sm:$0xff]
        %v154 = vld [vmem:[%s123 + $0x10] sm:$0xff]
        %v155 = vld [vmem:[%s123 + $0x18] sm:$0xff]
        %v156 = vld [vmem:[%s123 + $0x20] sm:$0xff]
        %v157 = vld [vmem:[%s123 + $0x28] sm:$0xf]
        %v158 = vld [vmem:[%s123 + $0x30] sm:$0xf]
        %v159 = vld [vmem:[%s123 + $0x38] sm:$0xf]
        %v160 = vld [vmem:[%s123 + $0x40] sm:$0xf]
        %v161 = vld [vmem:[%s123 + $0x48] sm:$0xf]
        %v162 = vxor.u32 %v152, 2147483648
        %v163 = vxor.u32 %v153, 2147483648
        %v164 = vxor.u32 %v154, 2147483648
        %v165 = vxor.u32 %v155, 2147483648
        %v166 = vxor.u32 %v156, 2147483648
        %v167 = vxor.u32 %v157, 2147483648
        %v168 = vxor.u32 %v158, 2147483648
        %v169 = vxor.u32 %v159, 2147483648
        %v170 = vxor.u32 %v160, 2147483648
        %v171 = vxor.u32 %v161, 2147483648
        %v172 = vmul.f32 %v162, 1.442695
        %v173 = vpow.pop %v172
        %v174 = vmul.f32 %v163, 1.442695
        %v175 = vpow.pop %v174
        %v176 = vmul.f32 %v164, 1.442695
        %v177 = vpow.pop %v176
        %v178 = vmul.f32 %v165, 1.442695
        %v179 = vpow.pop %v178
        %v180 = vmul.f32 %v166, 1.442695
        %v181 = vpow.pop %v180
        %v182 = vmul.f32 %v167, 1.442695
        %v183 = vpow.pop %v182
        %v184 = vmul.f32 %v168, 1.442695
        %v185 = vpow.pop %v184
        %v186 = vmul.f32 %v169, 1.442695
        %v187 = vpow.pop %v186
        %v188 = vmul.f32 %v170, 1.442695
        %v189 = vpow.pop %v188
        %v190 = vmul.f32 %v171, 1.442695
        %v191 = vpow.pop %v190
        %v192 = vadd.f32 %v173, 1.0
        %v193 = vadd.f32 %v175, 1.0
        %v194 = vadd.f32 %v177, 1.0
        %v195 = vadd.f32 %v179, 1.0
        %v196 = vadd.f32 %v181, 1.0
        %v197 = vadd.f32 %v183, 1.0
        %v198 = vadd.f32 %v185, 1.0
        %v199 = vadd.f32 %v187, 1.0
        %v200 = vadd.f32 %v189, 1.0
        %v201 = vadd.f32 %v191, 1.0
        %v202 = vrcp.pop %v192
        %v203 = vmul.f32 1.0, %v202
        %v204 = vrcp.pop %v193
        %v205 = vmul.f32 1.0, %v204
        %v206 = vrcp.pop %v194
        %v207 = vmul.f32 1.0, %v206
        %v208 = vrcp.pop %v195
        %v209 = vmul.f32 1.0, %v208
        %v210 = vrcp.pop %v196
        %v211 = vmul.f32 1.0, %v210
        %v212 = vrcp.pop %v197
        %v213 = vmul.f32 1.0, %v212
        %v214 = vrcp.pop %v198
        %v215 = vmul.f32 1.0, %v214
        %v216 = vrcp.pop %v199
        %v217 = vmul.f32 1.0, %v216
        %v218 = vrcp.pop %v200
        %v219 = vmul.f32 1.0, %v218
        %v220 = vrcp.pop %v201
        %v221 = vmul.f32 1.0, %v220
        %v222 = vmul.f32 %v152, %v203
        %v223 = vmul.f32 %v153, %v205
        %v224 = vmul.f32 %v154, %v207
        %v225 = vmul.f32 %v155, %v209
        %v226 = vmul.f32 %v156, %v211
        %227 = vst [vmem:[%s141] sm:$0xff] %v222
        %228 = vst [vmem:[%s141 + $0x8] sm:$0xff] %v223
        %229 = vst [vmem:[%s141 + $0x10] sm:$0xff] %v224
        %230 = vst [vmem:[%s141 + $0x18] sm:$0xff] %v225
        %231 = vst [vmem:[%s141 + $0x20] sm:$0xff] %v226
        %v232 = vld [vmem:[%s123 + $0x28] sm:$0x70]
        %v233 = vld [vmem:[%s123 + $0x30] sm:$0x70]
        %v234 = vld [vmem:[%s123 + $0x38] sm:$0x70]
        %v235 = vld [vmem:[%s123 + $0x40] sm:$0x70]
        %v236 = vld [vmem:[%s123 + $0x48] sm:$0x70]
        %v237 = vlaneseq
        %v238 = vshrl.u32 %v237, 7
        %v239 = vsub.s32 0, %v238
        %v240 = vrot.slane %v213, %v239
        %v241 = vlaneseq
        %v242 = vshrl.u32 %v241, 7
        %v243 = vsub.s32 0, %v242
        %v244 = vrot.slane %v215, %v243
        %v245 = vlaneseq
        %v246 = vshrl.u32 %v245, 7
        %v247 = vsub.s32 0, %v246
        %v248 = vrot.slane %v217, %v247
        %v249 = vlaneseq
        %v250 = vshrl.u32 %v249, 7
        %v251 = vsub.s32 0, %v250
        %v252 = vrot.slane %v219, %v251
        %v253 = vlaneseq
        %v254 = vshrl.u32 %v253, 7
        %v255 = vsub.s32 0, %v254
        %v256 = vrot.slane %v221, %v255
        %v257 = vmul.f32 %v232, %v240
        %v258 = vmul.f32 %v233, %v244
        %v259 = vmul.f32 %v234, %v248
        %v260 = vmul.f32 %v235, %v252
        %v261 = vmul.f32 %v236, %v256
        %v267 = vrot.slane %v257, 4
        %v268 = vrot.slane %v258, 4
        %v269 = vrot.slane %v259, 4
        %v270 = vrot.slane %v260, 4
        %v271 = vrot.slane %v261, 4
        %277 = vst [vmem:[%s141 + $0x28] sm:$0x7] %v267
        %278 = vst [vmem:[%s141 + $0x30] sm:$0x7] %v268
        %279 = vst [vmem:[%s141 + $0x38] sm:$0x7] %v269
        %280 = vst [vmem:[%s141 + $0x40] sm:$0x7] %v270
        %281 = vst [vmem:[%s141 + $0x48] sm:$0x7] %v271
        %v282 = vld [vmem:[%s123 + $0x28] sm:$0x80]
        %v283 = vld [vmem:[%s123 + $0x30] sm:$0x80]
        %v284 = vld [vmem:[%s123 + $0x38] sm:$0x80]
        %v285 = vld [vmem:[%s123 + $0x40] sm:$0x80]
        %v286 = vld [vmem:[%s123 + $0x48] sm:$0x80]
        %v287 = vld [vmem:[%s123 + $0x50] sm:$0x3]
        %v288 = vld [vmem:[%s123 + $0x58] sm:$0x3]
        %v289 = vld [vmem:[%s123 + $0x60] sm:$0x3]
        %v290 = vld [vmem:[%s123 + $0x68] sm:$0x3]
        %v291 = vld [vmem:[%s123 + $0x70] sm:$0x3]
        %v292 = vlaneseq
        %v293 = vshrl.u32 %v292, 7
        %v294 = vsub.s32 1, %v293
        %v295 = vrot.slane %v213, %v294
        %v296 = vlaneseq
        %v297 = vshrl.u32 %v296, 7
        %v298 = vsub.s32 1, %v297
        %v299 = vrot.slane %v215, %v298
        %v300 = vlaneseq
        %v301 = vshrl.u32 %v300, 7
        %v302 = vsub.s32 1, %v301
        %v303 = vrot.slane %v217, %v302
        %v304 = vlaneseq
        %v305 = vshrl.u32 %v304, 7
        %v306 = vsub.s32 1, %v305
        %v307 = vrot.slane %v219, %v306
        %v308 = vlaneseq
        %v309 = vshrl.u32 %v308, 7
        %v310 = vsub.s32 1, %v309
        %v311 = vrot.slane %v221, %v310
        %v312 = vmul.f32 %v282, %v295
        %v313 = vmul.f32 %v283, %v299
        %v314 = vmul.f32 %v284, %v303
        %v315 = vmul.f32 %v285, %v307
        %v316 = vmul.f32 %v286, %v311
        %v317 = vmul.f32 %v287, %v295
        %v318 = vmul.f32 %v288, %v299
        %v319 = vmul.f32 %v289, %v303
        %v320 = vmul.f32 %v290, %v307
        %v321 = vmul.f32 %v291, %v311
        %vm332 = vcmask 1043456
        %v333 = vrot.slane %v312, 4
        %v334 = vrot.slane %v317, 4
        %v335 = vsel %vm332, %v333, %v334
        %v336 = vrot.slane %v313, 4
        %v337 = vrot.slane %v318, 4
        %v338 = vsel %vm332, %v336, %v337
        %v339 = vrot.slane %v314, 4
        %v340 = vrot.slane %v319, 4
        %v341 = vsel %vm332, %v339, %v340
        %v342 = vrot.slane %v315, 4
        %v343 = vrot.slane %v320, 4
        %v344 = vsel %vm332, %v342, %v343
        %v345 = vrot.slane %v316, 4
        %v346 = vrot.slane %v321, 4
        %v347 = vsel %vm332, %v345, %v346
        %353 = vst [vmem:[%s141 + $0x28] sm:$0x38] %v335
        %354 = vst [vmem:[%s141 + $0x30] sm:$0x38] %v338
        %355 = vst [vmem:[%s141 + $0x38] sm:$0x38] %v341
        %356 = vst [vmem:[%s141 + $0x40] sm:$0x38] %v344
        %357 = vst [vmem:[%s141 + $0x48] sm:$0x38] %v347
        %v358 = vld [vmem:[%s123 + $0x50] sm:$0x1c]
        %v359 = vld [vmem:[%s123 + $0x58] sm:$0x1c]
        %v360 = vld [vmem:[%s123 + $0x60] sm:$0x1c]
        %v361 = vld [vmem:[%s123 + $0x68] sm:$0x1c]
        %v362 = vld [vmem:[%s123 + $0x70] sm:$0x1c]
        %v363 = vlaneseq
        %v364 = vshrl.u32 %v363, 7
        %v365 = vsub.s32 2, %v364
        %v366 = vrot.slane %v213, %v365
        %v367 = vlaneseq
        %v368 = vshrl.u32 %v367, 7
        %v369 = vsub.s32 2, %v368
        %v370 = vrot.slane %v215, %v369
        %v371 = vlaneseq
        %v372 = vshrl.u32 %v371, 7
        %v373 = vsub.s32 2, %v372
        %v374 = vrot.slane %v217, %v373
        %v375 = vlaneseq
        %v376 = vshrl.u32 %v375, 7
        %v377 = vsub.s32 2, %v376
        %v378 = vrot.slane %v219, %v377
        %v379 = vlaneseq
        %v380 = vshrl.u32 %v379, 7
        %v381 = vsub.s32 2, %v380
        %v382 = vrot.slane %v221, %v381
        %v383 = vmul.f32 %v358, %v366
        %v384 = vmul.f32 %v359, %v370
        %v385 = vmul.f32 %v360, %v374
        %v386 = vmul.f32 %v361, %v378
        %v387 = vmul.f32 %v362, %v382
        %v393 = vrot.slane %v383, 4
        %v394 = vrot.slane %v384, 4
        %v395 = vrot.slane %v385, 4
        %v396 = vrot.slane %v386, 4
        %v397 = vrot.slane %v387, 4
        %403 = vst [vmem:[%s141 + $0x28] sm:$0xc0] %v393
        %404 = vst [vmem:[%s141 + $0x30] sm:$0xc0] %v394
        %405 = vst [vmem:[%s141 + $0x38] sm:$0xc0] %v395
        %406 = vst [vmem:[%s141 + $0x40] sm:$0xc0] %v396
        %407 = vst [vmem:[%s141 + $0x48] sm:$0xc0] %v397
        %408 = vst [vmem:[%s141 + $0x50] sm:$0x1] %v393
        %409 = vst [vmem:[%s141 + $0x58] sm:$0x1] %v394
        %410 = vst [vmem:[%s141 + $0x60] sm:$0x1] %v395
        %411 = vst [vmem:[%s141 + $0x68] sm:$0x1] %v396
        %412 = vst [vmem:[%s141 + $0x70] sm:$0x1] %v397
        %v413 = vld [vmem:[%s123 + $0x50] sm:$0xe0]
        %v414 = vld [vmem:[%s123 + $0x58] sm:$0xe0]
        %v415 = vld [vmem:[%s123 + $0x60] sm:$0xe0]
        %v416 = vld [vmem:[%s123 + $0x68] sm:$0xe0]
        %v417 = vld [vmem:[%s123 + $0x70] sm:$0xe0]
        %v418 = vlaneseq
        %v419 = vshrl.u32 %v418, 7
        %v420 = vsub.s32 3, %v419
        %v421 = vrot.slane %v213, %v420
        %v422 = vlaneseq
        %v423 = vshrl.u32 %v422, 7
        %v424 = vsub.s32 3, %v423
        %v425 = vrot.slane %v215, %v424
        %v426 = vlaneseq
        %v427 = vshrl.u32 %v426, 7
        %v428 = vsub.s32 3, %v427
        %v429 = vrot.slane %v217, %v428
        %v430 = vlaneseq
        %v431 = vshrl.u32 %v430, 7
        %v432 = vsub.s32 3, %v431
        %v433 = vrot.slane %v219, %v432
        %v434 = vlaneseq
        %v435 = vshrl.u32 %v434, 7
        %v436 = vsub.s32 3, %v435
        %v437 = vrot.slane %v221, %v436
        %v438 = vmul.f32 %v413, %v421
        %v439 = vmul.f32 %v414, %v425
        %v440 = vmul.f32 %v415, %v429
        %v441 = vmul.f32 %v416, %v433
        %v442 = vmul.f32 %v417, %v437
        %v448 = vrot.slane %v438, 4
        %v449 = vrot.slane %v439, 4
        %v450 = vrot.slane %v440, 4
        %v451 = vrot.slane %v441, 4
        %v452 = vrot.slane %v442, 4
        %458 = vst [vmem:[%s141 + $0x50] sm:$0xe] %v448
        %459 = vst [vmem:[%s141 + $0x58] sm:$0xe] %v449
        %460 = vst [vmem:[%s141 + $0x60] sm:$0xe] %v450
        %461 = vst [vmem:[%s141 + $0x68] sm:$0xe] %v451
        %462 = vst [vmem:[%s141 + $0x70] sm:$0xe] %v452
        %s463 = sand.u32 %s52, 1
        %s464 = scalar_lea.sflag [#allocation4], %s463
        %s465 = sand.u32 %s52, 1
        %s466 = smul.addr %s465, 120
        %s467 = scalar_lea.vmem [#allocation5], %s466
        // Predicated region
        $region29: #{tpu_custom_call.1} parent=23 // pred_check
          %p468 = pneg %p62
        $region30: #{tpu_custom_call.1} parent=23 // pred_check_branch
          %470 = sbr.rel (%p468) target = $region32
        $region31: #{tpu_custom_call.1} parent=23 // pred_region
          %s471 = smul.u32 5, %s18
          %s472 = ssub.s32 9, %s471
          %p473 = scmp.lt.s32.totalorder %s472, 5
          %s474 = scalar_select %p473, %s472, 5
          %s475 = smul.u32 384, %s474
          %s477 = ssub.s32 1920, %s475
          %478 = vsyncadd %s464, %s477
          %p479 = scmp.ne.s32.totalorder 0, %s475
          %s480 = smul.addr %s471, 128
          %s481 = scalar_lea.hbm %s1, %s480
          %s482 = smul.u32 %s474, 8
          %s483 = smul.u32 %s482, 3
          %s484 = sshll.u32 %s467, 4
          %s485 = int_to_ptr.vmem [resolvable:$true] %s484
          %s486 = sshll.u32 %s483, 4
          %490 = dma.vmem_to_hbm [thread:$0]  (%p479), %s485, %s486, %s481, %s464, 640, 1152, %s482
        $region32: #{tpu_custom_call.1} parent=23 // pred_fallthru
          _
      $region24: #{tpu_custom_call.1} parent=5 // pred_fallthru
        _
      %p491 = scmp.le.s32.totalorder 2, %s13
      // Predicated region
      $region33: #{tpu_custom_call.1} parent=5 // pred_check
        %p492 = pneg %p491
      $region34: #{tpu_custom_call.1} parent=5 // pred_check_branch
        %494 = sbr.rel (%p492) target = $region36
      $region35: #{tpu_custom_call.1} parent=5 // pred_region
        %s495 = ssub.s32 %s13, 2
        // Predicated region
        $region37: #{tpu_custom_call.1} parent=35 // pred_check
          %p496 = pneg %p68
        $region38: #{tpu_custom_call.1} parent=35 // pred_check_branch
          %498 = sbr.rel (%p496) target = $region40
        $region39: #{tpu_custom_call.1} parent=35 // pred_region
          %s499 = sand.u32 %s53, 1
          %s500 = scalar_lea.sflag [#allocation4], %s499
          %s501 = sand.u32 %s53, 1
          %s502 = smul.addr %s501, 120
          %s503 = scalar_lea.vmem [#allocation5], %s502
          %504 = dma.done %s500, 1920
        $region40: #{tpu_custom_call.1} parent=35 // pred_fallthru
          _
      $region36: #{tpu_custom_call.1} parent=5 // pred_fallthru
        _
    $region6: #{tpu_custom_call.1} parent=1 // loop_footer
      %s17 = sadd.s32 1, %s13
    $region7: #{tpu_custom_call.1} parent=1 // loop_footer_branch
      %12 = sbr.rel target = $region3
    $region8: #{tpu_custom_call.1} parent=1 // loop_exit
      _
    %505 = vsyncpa [#allocation3], 1
    %s506 = scalar_lea.sflag [#allocation3], 1
    %507 = vsyncpa %s506, 1
    %508 = vsyncpa [#allocation4], 1
    %s509 = scalar_lea.sflag [#allocation4], 1
    %510 = vsyncpa %s509, 1

</llo_original>
